<compile_context>
chip_gen: v7x
topology: tpu7x:2x2x1
jax: 0.10.0
libtpu: 0.0.40
codegen_flags: <defaults>
</compile_context>

<pallas_src>
import jax
import jax.numpy as jnp
from jax.experimental import pallas as pl
from jax.experimental.pallas import tpu as pltpu


def _head_kernel(x_ref, w1_ref, b1_ref, w2_ref, b2_ref, o_ref):
    # dropout(p=0.0) is the identity, so it is elided.
    # Cast the streamed activations to the weight dtype (bf16 when the model
    # is f32) so the MXU runs at native rate; accumulate in f32.
    x = x_ref[...].astype(w1_ref.dtype)                      # (TM, D)
    h = jnp.dot(x, w1_ref[...], preferred_element_type=jnp.float32)
    h = h + b1_ref[...]                                      # f32 bias row (1, D)
    h = jnp.tanh(h)                                          # EUP, f32
    h = h.astype(w2_ref.dtype)                               # bf16 for the MXU
    y = jnp.dot(h, w2_ref[...], preferred_element_type=jnp.float32)
    y = y + b2_ref[...]                                      # f32 bias row (1, Lp)
    o_ref[...] = y.astype(o_ref.dtype)                       # lane-dense (TM, Lp) store


def switch_classification_head(hidden_states, w1, b1, w2, b2, *,
                               tm=1024, use_bf16_mxu=True):
    """hidden_states: (B, S, D).  Returns (B, S, num_labels)."""
    B, S, D = hidden_states.shape
    L = w2.shape[1]
    N = B * S
    in_dtype = hidden_states.dtype

    # --- MXU dtype: f32 matmul is slow multi-pass emulation; use bf16 -------
    if use_bf16_mxu and in_dtype == jnp.float32:
        w1 = w1.astype(jnp.bfloat16)
        w2 = w2.astype(jnp.bfloat16)

    # --- lane-dense output: pad num_labels up to one full 128-lane register --
    Lp = max(128, 128 * pl.cdiv(L, 128))
    if Lp != L:
        w2 = jnp.pad(w2, ((0, 0), (0, Lp - L)))   # zero columns -> no leakage
        b2 = jnp.pad(b2, (0, Lp - L))

    # --- adaptive row tiling --------------------------------------------------
    # Round N into near-equal 8-aligned tiles:
    #  * padding waste is at most ~7 rows per tile instead of up to TM-1,
    #  * keep >= 4 grid steps when the row count allows it so the grid can be
    #    sharded across both TensorCores on v7x (neutral on v5e/v6e).
    steps = max(pl.cdiv(N, tm), min(4, pl.cdiv(N, 8)), 1)
    TM = 8 * pl.cdiv(pl.cdiv(N, steps), 8)
    steps = pl.cdiv(N, TM)
    Np = steps * TM

    x2d = hidden_states.reshape(N, D)
    if Np != N:
        x2d = jnp.pad(x2d, ((0, Np - N), (0, 0)))  # tail rows sliced off below

    # Biases go in as f32 rows so the kernel epilogue has no per-step casts.
    b1_2d = b1.astype(jnp.float32).reshape(1, D)
    b2_2d = b2.astype(jnp.float32).reshape(1, Lp)

    # --- explicit VMEM budget -------------------------------------------------
    x_it = jnp.dtype(in_dtype).itemsize
    w_it = jnp.dtype(w1.dtype).itemsize
    footprint = (2 * TM * D * x_it          # x, double-buffered
                 + D * D * w_it + D * 4     # w1 + b1, single-buffered (Buffered(1))
                 + D * Lp * w_it + Lp * 4   # w2 + b2, single-buffered
                 + 2 * TM * Lp * x_it)      # out, double-buffered
    vmem_limit = int(min(max(footprint * 5 // 4 + (2 << 20), 32 << 20), 100 << 20))
    # TODO(synk): on v7x (64 MiB VMEM/TC) with f32 weights and D >= 2048, drop
    # tm or add a K-tiling axis; with the default bf16 weight path this fits.

    out = pl.pallas_call(
        _head_kernel,
        out_shape=jax.ShapeDtypeStruct((Np, Lp), in_dtype),
        grid_spec=pl.GridSpec(
            grid=(steps,),
            in_specs=[
                # streamed activations (double-buffered by default)
                pl.BlockSpec((TM, D), lambda i: (i, 0)),
                # resident operands: constant index map + single buffer
                pl.BlockSpec((D, D), lambda i: (0, 0),
                             pipeline_mode=pl.Buffered(1)),
                pl.BlockSpec((1, D), lambda i: (0, 0),
                             pipeline_mode=pl.Buffered(1)),
                pl.BlockSpec((D, Lp), lambda i: (0, 0),
                             pipeline_mode=pl.Buffered(1)),
                pl.BlockSpec((1, Lp), lambda i: (0, 0),
                             pipeline_mode=pl.Buffered(1)),
            ],
            out_specs=pl.BlockSpec((TM, Lp), lambda i: (i, 0)),
        ),
        compiler_params=pltpu.CompilerParams(
            # Rows are independent -> parallel axis (sharded across both TCs on
            # v7x when the grid has enough steps; neutral on v5e/v6e).
            dimension_semantics=("parallel",),
            vmem_limit_bytes=vmem_limit),
    )(x2d, w1, b1_2d, w2, b2_2d)

    return out[:N, :L].reshape(B, S, L)


if __name__ == "__main__":
    # Small shapes consistent with the module: batch=2, seq=8, d_model=32, labels=4
    B, S, D, L = 2, 8, 32, 4
    key = jax.random.PRNGKey(0)
    k_x, k_w1, k_b1, k_w2, k_b2 = jax.random.split(key, 5)

    x = jax.random.normal(k_x, (B, S, D), dtype=jnp.float32)

    # Deterministic init mimicking nn.Linear's uniform(-1/sqrt(fan_in), 1/sqrt(fan_in))
    bound1 = 1.0 / (D ** 0.5)
    w1 = jax.random.uniform(k_w1, (D, D), jnp.float32, -bound1, bound1)   # dense.weight.T
    b1 = jax.random.uniform(k_b1, (D,), jnp.float32, -bound1, bound1)     # dense.bias
    w2 = jax.random.uniform(k_w2, (D, L), jnp.float32, -bound1, bound1)   # out_proj.weight.T
    b2 = jax.random.uniform(k_b2, (L,), jnp.float32, -bound1, bound1)     # out_proj.bias

    y = switch_classification_head(x, w1, b1, w2, b2)
    jax.block_until_ready(y)

    # Pure-JAX f32 reference.  The kernel feeds the MXU in bf16 (f32 accumulate
    # + f32 tanh epilogue), so use a bf16-appropriate tolerance.
    ref = jnp.tanh(x.reshape(-1, D) @ w1 + b1) @ w2 + b2
    assert y.shape == (B, S, L)
    assert jnp.allclose(y.reshape(-1, L), ref, atol=2e-2, rtol=2e-2), (
        float(jnp.max(jnp.abs(y.reshape(-1, L) - ref))))

    print("KERNEL_OK")
</pallas_src>

<mosaic_0001>
module attributes {stable_mosaic.version = 11 : i64} {
  func.func @_head_kernel(%arg0: i32, %arg1: memref<8x32xf32, #tpu.memory_space<vmem>>, %arg2: memref<32x32xbf16, #tpu.memory_space<vmem>>, %arg3: memref<1x32xf32, #tpu.memory_space<vmem>>, %arg4: memref<32x128xbf16, #tpu.memory_space<vmem>>, %arg5: memref<1x128xf32, #tpu.memory_space<vmem>>, %arg6: memref<8x128xf32, #tpu.memory_space<vmem>>) attributes {dimension_semantics = [#tpu.dimension_semantics<parallel>], iteration_bounds = array<i64: 2>, scalar_prefetch = 0 : i64, scratch_operands = 0 : i64, tpu.core_type = #tpu.core_type<tc>, window_params = [{transform_indices = @transform_0, window_bounds = array<i64: 8, 32>}, {pipeline_mode = #tpu.pipeline_mode<synchronous>, transform_indices = @transform_1, window_bounds = array<i64: 32, 32>}, {pipeline_mode = #tpu.pipeline_mode<synchronous>, transform_indices = @transform_2, window_bounds = array<i64: 1, 32>}, {pipeline_mode = #tpu.pipeline_mode<synchronous>, transform_indices = @transform_3, window_bounds = array<i64: 32, 128>}, {pipeline_mode = #tpu.pipeline_mode<synchronous>, transform_indices = @transform_4, window_bounds = array<i64: 1, 128>}, {transform_indices = @transform_5, window_bounds = array<i64: 8, 128>}]} {
    %c0 = arith.constant 0 : index
    %c0_0 = arith.constant 0 : index
    %0 = vector.load %arg1[%c0, %c0_0] : memref<8x32xf32, #tpu.memory_space<vmem>>, vector<8x32xf32>
    %1 = arith.truncf %0 : vector<8x32xf32> to vector<8x32xbf16>
    %c0_1 = arith.constant 0 : index
    %c0_2 = arith.constant 0 : index
    %2 = vector.load %arg2[%c0_1, %c0_2] : memref<32x32xbf16, #tpu.memory_space<vmem>>, vector<32x32xbf16>
    %cst = arith.constant dense<0.000000e+00> : vector<8x32xf32>
    %3 = tpu.matmul %1, %2, %cst {dimension_numbers = #tpu.dot_dimension_numbers<[1], [0], [0], [1], [0, 0, 1, 1], [], []>} : vector<8x32xbf16>, vector<32x32xbf16>, vector<8x32xf32> -> vector<8x32xf32>
    %c0_3 = arith.constant 0 : index
    %c0_4 = arith.constant 0 : index
    %4 = vector.load %arg3[%c0_3, %c0_4] : memref<1x32xf32, #tpu.memory_space<vmem>>, vector<1x32xf32>
    %5 = vector.broadcast %4 : vector<1x32xf32> to vector<8x32xf32>
    %6 = arith.addf %3, %5 : vector<8x32xf32>
    %7 = math.tanh %6 : vector<8x32xf32>
    %8 = arith.truncf %7 : vector<8x32xf32> to vector<8x32xbf16>
    %c0_5 = arith.constant 0 : index
    %c0_6 = arith.constant 0 : index
    %9 = vector.load %arg4[%c0_5, %c0_6] : memref<32x128xbf16, #tpu.memory_space<vmem>>, vector<32x128xbf16>
    %cst_7 = arith.constant dense<0.000000e+00> : vector<8x128xf32>
    %10 = tpu.matmul %8, %9, %cst_7 {dimension_numbers = #tpu.dot_dimension_numbers<[1], [0], [0], [1], [0, 0, 1, 1], [], []>} : vector<8x32xbf16>, vector<32x128xbf16>, vector<8x128xf32> -> vector<8x128xf32>
    %c0_8 = arith.constant 0 : index
    %c0_9 = arith.constant 0 : index
    %11 = vector.load %arg5[%c0_8, %c0_9] : memref<1x128xf32, #tpu.memory_space<vmem>>, vector<1x128xf32>
    %12 = vector.broadcast %11 : vector<1x128xf32> to vector<8x128xf32>
    %13 = arith.addf %10, %12 : vector<8x128xf32>
    %c0_10 = arith.constant 0 : index
    %c0_11 = arith.constant 0 : index
    %14 = vector.load %arg6[%c0_10, %c0_11] : memref<8x128xf32, #tpu.memory_space<vmem>>, vector<8x128xf32>
    tpu.vector_store %arg6[%c0_10, %c0_11], %13 {strides = array<i32>} : memref<8x128xf32, #tpu.memory_space<vmem>>, vector<8x128xf32>,
    return
  }
  func.func @transform_0(%arg0: i32) -> (i32, i32) {
    %c0_i32 = arith.constant 0 : i32
    %c0_i32_0 = arith.constant 0 : i32
    return %arg0, %c0_i32 : i32, i32
  }
  func.func @transform_1(%arg0: i32) -> (i32, i32) {
    %c0_i32 = arith.constant 0 : i32
    %c0_i32_0 = arith.constant 0 : i32
    %c0_i32_1 = arith.constant 0 : i32
    return %c0_i32, %c0_i32_0 : i32, i32
  }
  func.func @transform_2(%arg0: i32) -> (i32, i32) {
    %c0_i32 = arith.constant 0 : i32
    %c0_i32_0 = arith.constant 0 : i32
    %c0_i32_1 = arith.constant 0 : i32
    return %c0_i32, %c0_i32_0 : i32, i32
  }
  func.func @transform_3(%arg0: i32) -> (i32, i32) {
    %c0_i32 = arith.constant 0 : i32
    %c0_i32_0 = arith.constant 0 : i32
    %c0_i32_1 = arith.constant 0 : i32
    return %c0_i32, %c0_i32_0 : i32, i32
  }
  func.func @transform_4(%arg0: i32) -> (i32, i32) {
    %c0_i32 = arith.constant 0 : i32
    %c0_i32_0 = arith.constant 0 : i32
    %c0_i32_1 = arith.constant 0 : i32
    return %c0_i32, %c0_i32_0 : i32, i32
  }
  func.func @transform_5(%arg0: i32) -> (i32, i32) {
    %c0_i32 = arith.constant 0 : i32
    %c0_i32_0 = arith.constant 0 : i32
    return %arg0, %c0_i32 : i32, i32
  }
}

</mosaic_0001>

<llo_original>
// kernel: tpu_custom_call.1
$region0: #{tpu_custom_call.1}
  #allocation0 [shape = 'u32[]', space=smem, size = 0x4, offset = 0x4, fixed_abs, tag = 'smem constant byte address 0x4 - core index']
  #allocation1 [shape = 'u32[144,128]{1,0:T(1,128)}', space=vmem, size = 0x12000, scoped, tag = 'internal scratch']
  %s0 = inlined_call_operand.hbm [shape: f32[16,32], index: 0, kind: input, shape index: {}]
  %s1 = inlined_call_operand.hbm [shape: bf16[32,32], index: 1, kind: input, shape index: {}]
  %s2 = inlined_call_operand.vmem [shape: f32[1,32], index: 2, kind: input, shape index: {}]
  %s3 = inlined_call_operand.hbm [shape: bf16[32,128], index: 3, kind: input, shape index: {}]
  %s4 = inlined_call_operand.vmem [shape: f32[1,128], index: 4, kind: input, shape index: {}]
  %s5 = inlined_call_operand.hbm [shape: f32[16,128], index: 5, kind: output, shape index: {}]
  %s6 = sld [smem:[#allocation0]]
  $region65: #{tpu_custom_call.1} parent=0
    _
  %s8 = ssub.s32 1, %s6
  %s9 = scalar_select 0, %s8, %s6
  $region1: #{tpu_custom_call.1} parent=0
    #allocation2 [shape = 'u8[8192]{0}', space=vmem, size = 0x2000, scoped, tag = 'input window, operand 0']
    #allocation3 [shape = 's32[2]{0}', space=sflag, size = 0x8, scoped, tag = 'scoped memory for tpu_custom_call.1']
    #allocation4 [shape = 's32[2]{0}', space=sflag, size = 0x8, scoped, tag = 'scoped memory for tpu_custom_call.1']
    #allocation5 [shape = 'u8[8192]{0}', space=vmem, size = 0x2000, scoped, tag = 'input window, operand 1, single buffered']
    #allocation6 [shape = 's32[1]{0}', space=sflag, size = 0x4, scoped, tag = 'scoped memory for tpu_custom_call.1']
    #allocation7 [shape = 'u8[8192]{0}', space=vmem, size = 0x2000, scoped, tag = 'input window, operand 3, single buffered']
    #allocation8 [shape = 'u8[8192]{0}', space=vmem, size = 0x2000, scoped, tag = 'output window, operand 0']
    %10 = vsyncpa [#allocation3], 0
    %s11 = scalar_lea.sflag [#allocation3], 1
    %12 = vsyncpa %s11, 0
    %13 = vsyncpa [#allocation6], 0
    %14 = vsyncpa [#allocation4], 0
    %s15 = scalar_lea.sflag [#allocation4], 1
    %16 = vsyncpa %s15, 0
    loop: start=0, step=1, limit=4
    $region2: #{tpu_custom_call.1} parent=1 // loop_pre_header
      _
    $region3: #{tpu_custom_call.1} parent=1 // loop_header
      %s18 = sphi 0, %s22
      %p19 = scmp.ge.s32.totalorder %s18, 4
      %s28 = sphi 0, %s30
      %s31 = sphi 0, %s28
      %s32 = sphi 0, %s31
      %s48 = sphi 0, %s32
      %s52 = sphi 0, %s52
      %s54 = sphi 0, %s52
      %s55 = sphi 0, %s54
      %s69 = sphi 0, %s55
      %s73 = sphi 0, %s73
      %s75 = sphi 0, %s73
      %s76 = sphi 0, %s75
      %s90 = sphi 0, %s76
      %s94 = sphi 0, %s94
      %s96 = sphi 0, %s94
      %s97 = sphi 0, %s96
      %s111 = sphi 0, %s97
      %s115 = sphi 0, %s115
      %s117 = sphi 0, %s115
      %s118 = sphi 0, %s117
      %s132 = sphi 0, %s118
      %s138 = sphi 0, %s140
      %s141 = sphi 0, %s138
      %s142 = sphi 0, %s141
      %s158 = sphi 0, %s142
    $region4: #{tpu_custom_call.1} parent=1 // loop_header_branch
      %21 = sbr.rel (%p19) target = $region8
    $region5: #{tpu_custom_call.1} parent=1 // loop_body
      %s23 = ssub.s32 %s18, 1
      %s24 = ssub.s32 %s18, 2
      %s25 = sadd.s32 %s18, 1
      %s26 = ssub.s32 %s18, %s25
      %p27 = scmp.eq.s32.totalorder %s26, 0
      %s29 = sadd.s32 %s28, 1
      %s30 = scalar_select %p27, %s28, %s29
      %p33 = pneg %p27
      %p34 = scmp.eq.s32.totalorder %s18, 1
      %p35 = por %p33, %p34
      %p36 = scmp.ne.s32.totalorder %s28, %s31
      %p37 = scmp.eq.s32.totalorder %s18, 0
      %p38 = por %p36, %p37
      %p39 = scmp.ne.s32.totalorder %s28, %s31
      %p40 = scmp.eq.s32.totalorder %s23, 1
      %p41 = por %p39, %p40
      %p42 = scmp.ne.s32.totalorder %s31, %s32
      %p43 = scmp.eq.s32.totalorder %s23, 0
      %p44 = por %p42, %p43
      %p45 = scmp.ne.s32.totalorder %s31, %s32
      %p46 = scmp.eq.s32.totalorder %s24, 1
      %p47 = por %p45, %p46
      %p49 = scmp.ne.s32.totalorder %s32, %s48
      %p50 = scmp.eq.s32.totalorder %s24, 0
      %p51 = por %p49, %p50
      %s53 = sadd.s32 %s52, 1
      %p56 = scmp.eq.s32.totalorder %s18, 1
      %p57 = scmp.ne.s32.totalorder %s52, %s54
      %p58 = scmp.eq.s32.totalorder %s18, 0
      %p59 = por %p57, %p58
      %p60 = scmp.ne.s32.totalorder %s52, %s54
      %p61 = scmp.eq.s32.totalorder %s23, 1
      %p62 = por %p60, %p61
      %p63 = scmp.ne.s32.totalorder %s54, %s55
      %p64 = scmp.eq.s32.totalorder %s23, 0
      %p65 = por %p63, %p64
      %p66 = scmp.ne.s32.totalorder %s54, %s55
      %p67 = scmp.eq.s32.totalorder %s24, 1
      %p68 = por %p66, %p67
      %p70 = scmp.ne.s32.totalorder %s55, %s69
      %p71 = scmp.eq.s32.totalorder %s24, 0
      %p72 = por %p70, %p71
      %s74 = sadd.s32 %s73, 1
      %p77 = scmp.eq.s32.totalorder %s18, 1
      %p78 = scmp.ne.s32.totalorder %s73, %s75
      %p79 = scmp.eq.s32.totalorder %s18, 0
      %p80 = por %p78, %p79
      %p81 = scmp.ne.s32.totalorder %s73, %s75
      %p82 = scmp.eq.s32.totalorder %s23, 1
      %p83 = por %p81, %p82
      %p84 = scmp.ne.s32.totalorder %s75, %s76
      %p85 = scmp.eq.s32.totalorder %s23, 0
      %p86 = por %p84, %p85
      %p87 = scmp.ne.s32.totalorder %s75, %s76
      %p88 = scmp.eq.s32.totalorder %s24, 1
      %p89 = por %p87, %p88
      %p91 = scmp.ne.s32.totalorder %s76, %s90
      %p92 = scmp.eq.s32.totalorder %s24, 0
      %p93 = por %p91, %p92
      %s95 = sadd.s32 %s94, 1
      %p98 = scmp.eq.s32.totalorder %s18, 1
      %p99 = scmp.ne.s32.totalorder %s94, %s96
      %p100 = scmp.eq.s32.totalorder %s18, 0
      %p101 = por %p99, %p100
      %p102 = scmp.ne.s32.totalorder %s94, %s96
      %p103 = scmp.eq.s32.totalorder %s23, 1
      %p104 = por %p102, %p103
      %p105 = scmp.ne.s32.totalorder %s96, %s97
      %p106 = scmp.eq.s32.totalorder %s23, 0
      %p107 = por %p105, %p106
      %p108 = scmp.ne.s32.totalorder %s96, %s97
      %p109 = scmp.eq.s32.totalorder %s24, 1
      %p110 = por %p108, %p109
      %p112 = scmp.ne.s32.totalorder %s97, %s111
      %p113 = scmp.eq.s32.totalorder %s24, 0
      %p114 = por %p112, %p113
      %s116 = sadd.s32 %s115, 1
      %p119 = scmp.eq.s32.totalorder %s18, 1
      %p120 = scmp.ne.s32.totalorder %s115, %s117
      %p121 = scmp.eq.s32.totalorder %s18, 0
      %p122 = por %p120, %p121
      %p123 = scmp.ne.s32.totalorder %s115, %s117
      %p124 = scmp.eq.s32.totalorder %s23, 1
      %p125 = por %p123, %p124
      %p126 = scmp.ne.s32.totalorder %s117, %s118
      %p127 = scmp.eq.s32.totalorder %s23, 0
      %p128 = por %p126, %p127
      %p129 = scmp.ne.s32.totalorder %s117, %s118
      %p130 = scmp.eq.s32.totalorder %s24, 1
      %p131 = por %p129, %p130
      %p133 = scmp.ne.s32.totalorder %s118, %s132
      %p134 = scmp.eq.s32.totalorder %s24, 0
      %p135 = por %p133, %p134
      %s136 = ssub.s32 %s18, %s25
      %p137 = scmp.eq.s32.totalorder %s136, 0
      %s139 = sadd.s32 %s138, 1
      %s140 = scalar_select %p137, %s138, %s139
      %p143 = pneg %p137
      %p144 = scmp.eq.s32.totalorder %s18, 1
      %p145 = por %p143, %p144
      %p146 = scmp.ne.s32.totalorder %s138, %s141
      %p147 = scmp.eq.s32.totalorder %s18, 0
      %p148 = por %p146, %p147
      %p149 = scmp.ne.s32.totalorder %s138, %s141
      %p150 = scmp.eq.s32.totalorder %s23, 1
      %p151 = por %p149, %p150
      %p152 = scmp.ne.s32.totalorder %s141, %s142
      %p153 = scmp.eq.s32.totalorder %s23, 0
      %p154 = por %p152, %p153
      %p155 = scmp.ne.s32.totalorder %s141, %s142
      %p156 = scmp.eq.s32.totalorder %s24, 1
      %p157 = por %p155, %p156
      %p159 = scmp.ne.s32.totalorder %s142, %s158
      %p160 = scmp.eq.s32.totalorder %s24, 0
      %p161 = por %p159, %p160
      %p162 = scmp.le.s32.totalorder 1, %s18
      %p163 = scmp.lt.s32.totalorder %s18, 3
      %p164 = pnand %p162, %p163
      %p165 = pneg %p164
      // Predicated region
      $region9: #{tpu_custom_call.1} parent=5 // pred_check
        _
      $region10: #{tpu_custom_call.1} parent=5 // pred_check_branch
        %167 = sbr.rel (%p164) target = $region12
      $region11: #{tpu_custom_call.1} parent=5 // pred_region
        %s168 = ssub.s32 %s18, 1
        // Predicated region
        $region13: #{tpu_custom_call.1} parent=11 // pred_check
          %p169 = pneg %p65
        $region14: #{tpu_custom_call.1} parent=11 // pred_check_branch
          %171 = sbr.rel (%p169) target = $region16
        $region15: #{tpu_custom_call.1} parent=11 // pred_region
          %s173 = ssub.s32 256, 256
          %174 = vsyncadd [#allocation6], %s173
          %s175 = sshll.u32 [#allocation5], 4
          %s176 = int_to_ptr.vmem [resolvable:$true] %s175
          %181 = dma.hbm_to_vmem [thread:$0]  %s1, 256, %s176, [#allocation6], 64, 64, 4
        $region16: #{tpu_custom_call.1} parent=11 // pred_fallthru
          _
        // Predicated region
        $region17: #{tpu_custom_call.1} parent=11 // pred_check
          %p182 = pneg %p86
        $region18: #{tpu_custom_call.1} parent=11 // pred_check_branch
          %184 = sbr.rel (%p182) target = $region20
        $region19: #{tpu_custom_call.1} parent=11 // pred_region
          _
        $region20: #{tpu_custom_call.1} parent=11 // pred_fallthru
          _
        // Predicated region
        $region21: #{tpu_custom_call.1} parent=11 // pred_check
          %p185 = pneg %p107
        $region22: #{tpu_custom_call.1} parent=11 // pred_check_branch
          %187 = sbr.rel (%p185) target = $region24
        $region23: #{tpu_custom_call.1} parent=11 // pred_region
          %s189 = ssub.s32 256, 256
          %190 = vsyncadd [#allocation6], %s189
          %s191 = sshll.u32 [#allocation7], 4
          %s192 = int_to_ptr.vmem [resolvable:$true] %s191
          %197 = dma.hbm_to_vmem [thread:$0]  %s3, 256, %s192, [#allocation6], 64, 64, 4
        $region24: #{tpu_custom_call.1} parent=11 // pred_fallthru
          _
        // Predicated region
        $region25: #{tpu_custom_call.1} parent=11 // pred_check
          %p198 = pneg %p128
        $region26: #{tpu_custom_call.1} parent=11 // pred_check_branch
          %200 = sbr.rel (%p198) target = $region28
        $region27: #{tpu_custom_call.1} parent=11 // pred_region
          _
        $region28: #{tpu_custom_call.1} parent=11 // pred_fallthru
          _
      $region12: #{tpu_custom_call.1} parent=5 // pred_fallthru
        _
      %p201 = scmp.lt.s32.totalorder %s18, 2
      // Predicated region
      $region29: #{tpu_custom_call.1} parent=5 // pred_check
        %p202 = pneg %p201
      $region30: #{tpu_custom_call.1} parent=5 // pred_check_branch
        %204 = sbr.rel (%p202) target = $region32
      $region31: #{tpu_custom_call.1} parent=5 // pred_region
        // Predicated region
        $region33: #{tpu_custom_call.1} parent=31 // pred_check
          %p205 = pneg %p38
        $region34: #{tpu_custom_call.1} parent=31 // pred_check_branch
          %207 = sbr.rel (%p205) target = $region36
        $region35: #{tpu_custom_call.1} parent=31 // pred_region
          %s208 = sand.u32 %s28, 1
          %s209 = scalar_lea.sflag [#allocation3], %s208
          %s210 = sand.u32 %s28, 1
          %s211 = smul.addr %s210, 8
          %s212 = scalar_lea.vmem [#allocation2], %s211
          %s214 = ssub.s32 128, 128
          %215 = vsyncadd %s209, %s214
          %s216 = smul.addr %s18, 128
          %s217 = scalar_lea.hbm %s0, %s216
          %s219 = sshll.u32 %s212, 4
          %s220 = int_to_ptr.vmem [resolvable:$true] %s219
          %222 = dma.hbm_to_vmem [thread:$0]  %s217, 128, %s220, %s209
        $region36: #{tpu_custom_call.1} parent=31 // pred_fallthru
          _
      $region32: #{tpu_custom_call.1} parent=5 // pred_fallthru
        _
      %p223 = scmp.le.s32.totalorder 1, %s18
      %p224 = scmp.lt.s32.totalorder %s18, 3
      %p225 = pnand %p223, %p224
      %p226 = pneg %p225
      // Predicated region
      $region37: #{tpu_custom_call.1} parent=5 // pred_check
        _
      $region38: #{tpu_custom_call.1} parent=5 // pred_check_branch
        %228 = sbr.rel (%p225) target = $region40
      $region39: #{tpu_custom_call.1} parent=5 // pred_region
        %s229 = ssub.s32 %s18, 1
        %s230 = sand.u32 %s31, 1
        %s231 = scalar_lea.sflag [#allocation3], %s230
        %s232 = sand.u32 %s31, 1
        %s233 = smul.addr %s232, 8
        %s234 = scalar_lea.vmem [#allocation2], %s233
        // Predicated region
        $region41: #{tpu_custom_call.1} parent=39 // pred_check
          %p235 = pneg %p44
        $region42: #{tpu_custom_call.1} parent=39 // pred_check_branch
          %237 = sbr.rel (%p235) target = $region44
        $region43: #{tpu_custom_call.1} parent=39 // pred_region
          %238 = dma.done %s231, 128
        $region44: #{tpu_custom_call.1} parent=39 // pred_fallthru
          _
        // Predicated region
        $region45: #{tpu_custom_call.1} parent=39 // pred_check
          %p239 = pneg %p65
        $region46: #{tpu_custom_call.1} parent=39 // pred_check_branch
          %241 = sbr.rel (%p239) target = $region48
        $region47: #{tpu_custom_call.1} parent=39 // pred_region
          %242 = dma.done [#allocation6], 256
        $region48: #{tpu_custom_call.1} parent=39 // pred_fallthru
          _
        // Predicated region
        $region49: #{tpu_custom_call.1} parent=39 // pred_check
          %p243 = pneg %p107
        $region50: #{tpu_custom_call.1} parent=39 // pred_check_branch
          %245 = sbr.rel (%p243) target = $region52
        $region51: #{tpu_custom_call.1} parent=39 // pred_region
          %246 = dma.done [#allocation6], 256
        $region52: #{tpu_custom_call.1} parent=39 // pred_fallthru
          _
        %s247 = sand.u32 %s31, 1
        %s248 = scalar_lea.sflag [#allocation3], %s247
        %s249 = sand.u32 %s31, 1
        %s250 = smul.addr %s249, 8
        %s251 = scalar_lea.vmem [#allocation2], %s250
        %p252 = pneg %p44
        %p253 = pneg %p41
        %p254 = pneg %p65
        %p255 = pneg %p62
        %p256 = pneg %p86
        %p257 = pneg %p83
        %p258 = pneg %p107
        %p259 = pneg %p104
        %p260 = pneg %p128
        %p261 = pneg %p125
        %p262 = pneg %p154
        %p263 = pneg %p151
        %s264 = sand.u32 %s141, 1
        %s265 = scalar_lea.sflag [#allocation4], %s264
        %s266 = sand.u32 %s141, 1
        %s267 = smul.addr %s266, 8
        %s268 = scalar_lea.vmem [#allocation8], %s267
        %v270 = vld [vmem:[%s234] sm:$0xff]
        %v271 = vpack.c.bf16 %v270, %v270
        %v272 = vld [vmem:[#allocation5] sm:$0xf]
        %v273 = vld [vmem:[#allocation5 + $0x4] sm:$0xf]
        %v274 = vld [vmem:[#allocation5 + $0x8] sm:$0xf]
        %v275 = vld [vmem:[#allocation5 + $0xc] sm:$0xf]
        %v276 = vld [vmem:[%s2] sm:$0x1]
        %v278 = vlaneseq
        %v279 = vshrl.u32 %v278, 7
        %v280 = vsub.s32 0, %v279
        %v281 = vrot.slane %v276, %v280
        %v287 = vunpack.c.l.b16 %v272
        %v288 = vunpack.c.l.b16 %v273
        %v289 = vunpack.c.l.b16 %v274
        %v290 = vunpack.c.l.b16 %v275
        %v291 = vpack.c.b16 %v288, %v287
        %v292 = vpack.c.b16 %v290, %v289
        %vm295 = vcmask 261120
        %v297 = vsel %vm295, %v271, 0
        %299 = vmatprep.subr.bf16.mxu0 0
        %300 = vmatpush1.bf16.msra.mxu0 %v291
        %301 = vmatprep.subr.bf16.mxu0 0
        %302 = vmatpush1.bf16.msra.mxu0 %v292
        %303 = vmatprep.subr.bf16.mxu0 0
        %304 = vmatpush1.bf16.msra.mxu0 0
        %305 = vmatprep.subr.bf16.mxu0 0
        %306 = vmatpush1.bf16.msra.mxu0 0
        %307 = vmatprep.subr.bf16.mxu0 0
        %308 = vmatpush1.bf16.msra.mxu0 0
        %309 = vmatprep.subr.bf16.mxu0 0
        %310 = vmatpush1.bf16.msra.mxu0 0
        %311 = vmatprep.subr.bf16.mxu0 0
        %312 = vmatpush1.bf16.msra.mxu0 0
        %313 = vmatprep.subr.bf16.mxu0 0
        %314 = vmatpush1.bf16.msra.mxu0 0
        %315 = vmatprep.subr.bf16.mxu0 0
        %316 = vmatpush1.bf16.msra.mxu0 0
        %317 = vmatprep.subr.bf16.mxu0 0
        %318 = vmatpush1.bf16.msra.mxu0 0
        %319 = vmatprep.subr.bf16.mxu0 0
        %320 = vmatpush1.bf16.msra.mxu0 0
        %321 = vmatprep.subr.bf16.mxu0 0
        %322 = vmatpush1.bf16.msra.mxu0 0
        %323 = vmatprep.subr.bf16.mxu0 0
        %324 = vmatpush1.bf16.msra.mxu0 0
        %325 = vmatprep.subr.bf16.mxu0 0
        %326 = vmatpush1.bf16.msra.mxu0 0
        %327 = vmatprep.subr.bf16.mxu0 0
        %328 = vmatpush1.bf16.msra.mxu0 0
        %329 = vmatprep.subr.bf16.mxu0 0
        %330 = vmatpush1.bf16.msra.mxu0 0
        %331 = vmatprep.mubr.bf16.mxu0 0
        %332 = vmatmul.mubr.bf16.gmra.mrb[0].mxu0 %v297
        %v333 = vpop.f32.mrb[0].mxu0
        %v334 = vadd.f32 %v281, %v333
        %v335 = vpop.f32.mrb[0].mxu0
        %v336 = vpop.f32.mrb[0].mxu0
        %v337 = vpop.f32.mrb[0].mxu0
        %338 = vdwg.mxu0
        %v339 = vtanh.pop %v334
        %v340 = vpack.c.bf16 %v339, %v339
        %v341 = vld [vmem:[#allocation7] sm:$0xf]
        %v342 = vld [vmem:[#allocation7 + $0x4] sm:$0xf]
        %v343 = vld [vmem:[#allocation7 + $0x8] sm:$0xf]
        %v344 = vld [vmem:[#allocation7 + $0xc] sm:$0xf]
        %v345 = vld [vmem:[%s4] sm:$0x1]
        %v347 = vlaneseq
        %v348 = vshrl.u32 %v347, 7
        %v349 = vsub.s32 0, %v348
        %v350 = vrot.slane %v345, %v349
        %v356 = vunpack.c.l.b16 %v341
        %v357 = vunpack.c.l.b16 %v342
        %v358 = vunpack.c.l.b16 %v343
        %v359 = vunpack.c.l.b16 %v344
        %v360 = vpack.c.b16 %v357, %v356
        %v361 = vpack.c.b16 %v359, %v358
        %v365 = vsel %vm295, %v340, 0
        %367 = vmatprep.subr.bf16.mxu0 0
        %368 = vmatpush1.bf16.msra.mxu0 %v360
        %369 = vmatprep.subr.bf16.mxu0 0
        %370 = vmatpush1.bf16.msra.mxu0 %v361
        %371 = vmatprep.subr.bf16.mxu0 0
        %372 = vmatpush1.bf16.msra.mxu0 0
        %373 = vmatprep.subr.bf16.mxu0 0
        %374 = vmatpush1.bf16.msra.mxu0 0
        %375 = vmatprep.subr.bf16.mxu0 0
        %376 = vmatpush1.bf16.msra.mxu0 0
        %377 = vmatprep.subr.bf16.mxu0 0
        %378 = vmatpush1.bf16.msra.mxu0 0
        %379 = vmatprep.subr.bf16.mxu0 0
        %380 = vmatpush1.bf16.msra.mxu0 0
        %381 = vmatprep.subr.bf16.mxu0 0
        %382 = vmatpush1.bf16.msra.mxu0 0
        %383 = vmatprep.subr.bf16.mxu0 0
        %384 = vmatpush1.bf16.msra.mxu0 0
        %385 = vmatprep.subr.bf16.mxu0 0
        %386 = vmatpush1.bf16.msra.mxu0 0
        %387 = vmatprep.subr.bf16.mxu0 0
        %388 = vmatpush1.bf16.msra.mxu0 0
        %389 = vmatprep.subr.bf16.mxu0 0
        %390 = vmatpush1.bf16.msra.mxu0 0
        %391 = vmatprep.subr.bf16.mxu0 0
        %392 = vmatpush1.bf16.msra.mxu0 0
        %393 = vmatprep.subr.bf16.mxu0 0
        %394 = vmatpush1.bf16.msra.mxu0 0
        %395 = vmatprep.subr.bf16.mxu0 0
        %396 = vmatpush1.bf16.msra.mxu0 0
        %397 = vmatprep.subr.bf16.mxu0 0
        %398 = vmatpush1.bf16.msra.mxu0 0
        %399 = vmatprep.mubr.bf16.mxu0 0
        %400 = vmatmul.mubr.bf16.gmra.mrb[0].mxu0 %v365
        %v401 = vpop.f32.mrb[0].mxu0
        %v402 = vadd.f32 %v350, %v401
        %v403 = vpop.f32.mrb[0].mxu0
        %v404 = vpop.f32.mrb[0].mxu0
        %v405 = vpop.f32.mrb[0].mxu0
        %406 = vdwg.mxu0
        %407 = vst [vmem:[%s268] sm:$0xff] %v402
        %s408 = sand.u32 %s141, 1
        %s409 = scalar_lea.sflag [#allocation4], %s408
        %s410 = sand.u32 %s141, 1
        %s411 = smul.addr %s410, 8
        %s412 = scalar_lea.vmem [#allocation8], %s411
        // Predicated region
        $region53: #{tpu_custom_call.1} parent=39 // pred_check
          %p413 = pneg %p151
        $region54: #{tpu_custom_call.1} parent=39 // pred_check_branch
          %415 = sbr.rel (%p413) target = $region56
        $region55: #{tpu_custom_call.1} parent=39 // pred_region
          %s417 = ssub.s32 128, 128
          %418 = vsyncadd %s409, %s417
          %s419 = smul.addr %s23, 128
          %s420 = scalar_lea.hbm %s5, %s419
          %s422 = sshll.u32 %s412, 4
          %s423 = int_to_ptr.vmem [resolvable:$true] %s422
          %425 = dma.vmem_to_hbm [thread:$0]  %s423, 128, %s420, %s409
        $region56: #{tpu_custom_call.1} parent=39 // pred_fallthru
          _
      $region40: #{tpu_custom_call.1} parent=5 // pred_fallthru
        _
      %p426 = scmp.le.s32.totalorder 2, %s18
      // Predicated region
      $region57: #{tpu_custom_call.1} parent=5 // pred_check
        %p427 = pneg %p426
      $region58: #{tpu_custom_call.1} parent=5 // pred_check_branch
        %429 = sbr.rel (%p427) target = $region60
      $region59: #{tpu_custom_call.1} parent=5 // pred_region
        %s430 = ssub.s32 %s18, 2
        // Predicated region
        $region61: #{tpu_custom_call.1} parent=59 // pred_check
          %p431 = pneg %p157
        $region62: #{tpu_custom_call.1} parent=59 // pred_check_branch
          %433 = sbr.rel (%p431) target = $region64
        $region63: #{tpu_custom_call.1} parent=59 // pred_region
          %s434 = sand.u32 %s142, 1
          %s435 = scalar_lea.sflag [#allocation4], %s434
          %s436 = sand.u32 %s142, 1
          %s437 = smul.addr %s436, 8
          %s438 = scalar_lea.vmem [#allocation8], %s437
          %439 = dma.done %s435, 128
        $region64: #{tpu_custom_call.1} parent=59 // pred_fallthru
          _
      $region60: #{tpu_custom_call.1} parent=5 // pred_fallthru
        _
    $region6: #{tpu_custom_call.1} parent=1 // loop_footer
      %s22 = sadd.s32 1, %s18
    $region7: #{tpu_custom_call.1} parent=1 // loop_footer_branch
      %17 = sbr.rel target = $region3
    $region8: #{tpu_custom_call.1} parent=1 // loop_exit
      _
    %440 = vsyncpa [#allocation3], 1
    %s441 = scalar_lea.sflag [#allocation3], 1
    %442 = vsyncpa %s441, 1
    %443 = vsyncpa [#allocation6], 1
    %444 = vsyncpa [#allocation4], 1
    %s445 = scalar_lea.sflag [#allocation4], 1
    %446 = vsyncpa %s445, 1

</llo_original>
